<compile_context>
chip_gen: v7x
topology: tpu7x:2x2x1
jax: 0.10.0
libtpu: 0.0.40
codegen_flags: <defaults>
</compile_context>

<pallas_src>
import functools

import numpy as np

import jax
import jax.numpy as jnp
from jax.experimental import pallas as pl
from jax.experimental.pallas import tpu as pltpu

_SUBLANE = 8
_VMEM_BUDGET = 28 * 1024 * 1024  # conservative: safe under v7x's 64 MiB/TC


def _round_up(a, m):
    return (a + m - 1) // m * m


def _cdiv(a, b):
    return (a + b - 1) // b


def _freq_bands(N_freqs, logscale):
    if logscale:
        return [float(2.0 ** k) for k in range(N_freqs)]
    return [float(v) for v in
            np.linspace(1.0, 2.0 ** (N_freqs - 1), N_freqs).astype(np.float32)]


def _embedding_kernel(w_ref, tag_ref, x_ref, o_ref, *, in_channels):
    """One batch tile: build dense angle slab, one sin + one cos, one store."""
    C = in_channels
    x = x_ref[...].astype(jnp.float32)        # (tb, C)  batch on sublanes
    w = w_ref[...]                            # (C, GC)  per-(chan, col) weight
    tag = tag_ref[...]                        # (1, GC)  0=identity,1=sin,2=cos

    # lin[:, j] = f(j) * x[:, chan(j)]  (exactly one nonzero term per column,
    # so the product matches the reference's single f32 multiply).
    lin = x[:, 0:1] * w[0:1, :]
    for c in range(1, C):                     # static, tiny (C ~ 3)
        lin = lin + x[:, c:c + 1] * w[c:c + 1, :]

    s = jnp.sin(lin)                          # exact, full-slab
    cs = jnp.cos(lin)                         # exact, full-slab
    out = jnp.where(tag == 0, lin, jnp.where(tag == 2, cs, s))
    o_ref[...] = out.astype(o_ref.dtype)      # single full-tile aligned store


def make_embedding(in_channels, N_freqs, logscale=True, *, block_rows=16384,
                   out_dtype=None):
    """Returns (apply_fn, out_channels) mirroring the PyTorch Embedding."""
    C = in_channels
    G = 2 * N_freqs + 1
    GC = C * G
    freqs = _freq_bands(N_freqs, logscale)

    # Per-output-column constants (torch.cat column order):
    #   w[c, j]  : multiplier applied to channel c for column j (freq / 1 / 0)
    #   tag[0,j] : 0 -> identity column, 1 -> sin column, 2 -> cos column
    w_np = np.zeros((C, GC), np.float32)
    tag_np = np.zeros((1, GC), np.int32)
    for c in range(C):
        w_np[c, c] = 1.0
    for k, f in enumerate(freqs):
        for c in range(C):
            js = C + (2 * k) * C + c
            jc = C + (2 * k + 1) * C + c
            w_np[c, js] = f
            w_np[c, jc] = f
            tag_np[0, js] = 1
            tag_np[0, jc] = 2
    w_arr = jnp.asarray(w_np)
    tag_arr = jnp.asarray(tag_np)

    kernel = functools.partial(_embedding_kernel, in_channels=C)

    def _pick_tile(B, in_itemsize, out_itemsize):
        B8 = _round_up(max(B, 1), _SUBLANE)
        # double-buffered in+out blocks + ~4 live f32 intermediates per row.
        per_row = 2 * (C * in_itemsize + GC * out_itemsize) + 4 * GC * 4
        cap = max((_VMEM_BUDGET // per_row) // _SUBLANE * _SUBLANE, _SUBLANE)
        tb = min(_round_up(block_rows, _SUBLANE), cap, B8)
        # >= 4-8 grid steps when the batch is big enough, so the pipeline can
        # overlap DMA/compute and both v7x TensorCores get work; keep >=1024
        # rows per step so the ~0.35 us per-step overhead stays amortized.
        target = min(8, max(B8 // 1024, 1))
        if _cdiv(B8, tb) < target:
            tb = max(_round_up(_cdiv(B8, target), _SUBLANE), _SUBLANE)
        return tb

    def _forward(x):
        assert x.shape[-1] == C, x.shape
        odtype = jnp.dtype(out_dtype) if out_dtype is not None else x.dtype
        lead = x.shape[:-1]
        x2 = x.reshape(-1, C)
        B = x2.shape[0]

        tb = _pick_tile(B, jnp.dtype(x.dtype).itemsize,
                        jnp.dtype(odtype).itemsize)
        grid_b = _cdiv(B, tb)

        cost = pl.CostEstimate(
            flops=8 * B * GC,
            transcendentals=2 * B * GC,
            bytes_accessed=B * C * jnp.dtype(x.dtype).itemsize
            + B * GC * jnp.dtype(odtype).itemsize)

        out = pl.pallas_call(
            kernel,
            out_shape=jax.ShapeDtypeStruct((B, GC), odtype),
            grid_spec=pltpu.PrefetchScalarGridSpec(
                num_scalar_prefetch=0,
                grid=(grid_b,),
                in_specs=[
                    pl.BlockSpec((C, GC), lambda i: (0, 0)),   # column weights
                    pl.BlockSpec((1, GC), lambda i: (0, 0)),   # column tags
                    pl.BlockSpec((tb, C), lambda i: (i, 0)),   # x batch tile
                ],
                out_specs=pl.BlockSpec((tb, GC), lambda i: (i, 0)),
            ),
            compiler_params=pltpu.CompilerParams(
                dimension_semantics=("parallel",)),
            cost_estimate=cost,
        )(w_arr, tag_arr, x2)
        return out.reshape(*lead, GC)

    @jax.custom_vjp
    def embed(x):
        return _forward(x)

    def _fwd(x):
        return _forward(x), x

    def _bwd(x, g):
        # d/dx [x, sin(f x), cos(f x), ...] . g
        # TODO(synk): move the backward into a Pallas kernel if it ever shows
        # up in profiles; plain XLA is fine for the GNeRF pose gradients.
        xf = x.astype(jnp.float32)
        gf = g.astype(jnp.float32)
        dx = gf[..., :C]
        for k, f in enumerate(freqs):
            lo = C + 2 * k * C
            gs = gf[..., lo:lo + C]
            gc = gf[..., lo + C:lo + 2 * C]
            fx = f * xf
            dx = dx + f * (gs * jnp.cos(fx) - gc * jnp.sin(fx))
        return (dx.astype(x.dtype),)

    embed.defvjp(_fwd, _bwd)
    return embed, GC


def _reference(x, N_freqs, logscale=True):
    outs = [x]
    for f in _freq_bands(N_freqs, logscale):
        outs.append(jnp.sin(f * x))
        outs.append(jnp.cos(f * x))
    return jnp.concatenate(outs, axis=-1)


if __name__ == "__main__":
    in_channels = 3
    N_freqs = 4
    B = 16

    key = jax.random.PRNGKey(0)
    x = jax.random.normal(key, (B, in_channels), dtype=jnp.float32)

    embed, out_channels = make_embedding(in_channels, N_freqs, logscale=True)
    out = jax.block_until_ready(embed(x))
    assert out.shape == (B, out_channels), out.shape

    ref = _reference(x, N_freqs, logscale=True)
    # Exact sin/cos in-kernel; tolerance only covers transcendental-lowering
    # ULP differences between Mosaic and XLA.
    assert jnp.allclose(out, ref, atol=1e-5, rtol=1e-5), "forward mismatch"

    # Leading-dimension handling (reshape-only, no extra HBM passes).
    out3 = jax.block_until_ready(embed(x.reshape(2, 8, in_channels)))
    assert out3.shape == (2, 8, out_channels), out3.shape
    assert jnp.allclose(out3.reshape(B, out_channels), ref,
                        atol=1e-5, rtol=1e-5), "leading-dim mismatch"

    # Gradient w.r.t. x (GNeRF optimizes poses/positions through the embedding).
    ct = jax.random.normal(jax.random.PRNGKey(1), (B, out_channels),
                           dtype=jnp.float32)
    g_kernel = jax.grad(lambda xx: jnp.sum(embed(xx) * ct))(x)
    g_ref = jax.grad(lambda xx: jnp.sum(_reference(xx, N_freqs, True) * ct))(x)
    assert jnp.allclose(g_kernel, g_ref, atol=1e-4, rtol=1e-4), "grad mismatch"

    print("KERNEL_OK")
</pallas_src>

<mosaic_0001>
module attributes {stable_mosaic.version = 11 : i64} {
  func.func @_embedding_kernel(%arg0: i32, %arg1: memref<3x27xf32, #tpu.memory_space<vmem>>, %arg2: memref<1x27xi32, #tpu.memory_space<vmem>>, %arg3: memref<16x3xf32, #tpu.memory_space<vmem>>, %arg4: memref<16x27xf32, #tpu.memory_space<vmem>>) attributes {dimension_semantics = [#tpu.dimension_semantics<parallel>], iteration_bounds = array<i64: 1>, scalar_prefetch = 0 : i64, scratch_operands = 0 : i64, tpu.core_type = #tpu.core_type<tc>, window_params = [{pipeline_mode = #tpu.pipeline_mode<synchronous>, transform_indices = @transform_0, window_bounds = array<i64: 3, 27>}, {pipeline_mode = #tpu.pipeline_mode<synchronous>, transform_indices = @transform_1, window_bounds = array<i64: 1, 27>}, {transform_indices = @transform_2, window_bounds = array<i64: 16, 3>}, {transform_indices = @transform_3, window_bounds = array<i64: 16, 27>}]} {
    %c0 = arith.constant 0 : index
    %c0_0 = arith.constant 0 : index
    %0 = vector.load %arg3[%c0, %c0_0] : memref<16x3xf32, #tpu.memory_space<vmem>>, vector<16x3xf32>
    %c0_1 = arith.constant 0 : index
    %c0_2 = arith.constant 0 : index
    %1 = vector.load %arg1[%c0_1, %c0_2] : memref<3x27xf32, #tpu.memory_space<vmem>>, vector<3x27xf32>
    %c0_3 = arith.constant 0 : index
    %c0_4 = arith.constant 0 : index
    %2 = vector.load %arg2[%c0_3, %c0_4] : memref<1x27xi32, #tpu.memory_space<vmem>>, vector<1x27xi32>
    %3 = vector.extract_strided_slice %0 {offsets = [0, 0], sizes = [16, 1], strides = [1, 1]} : vector<16x3xf32> to vector<16x1xf32>
    %4 = vector.extract_strided_slice %1 {offsets = [0, 0], sizes = [1, 27], strides = [1, 1]} : vector<3x27xf32> to vector<1x27xf32>
    %5 = vector.broadcast %3 : vector<16x1xf32> to vector<16x27xf32>
    %6 = vector.broadcast %4 : vector<1x27xf32> to vector<16x27xf32>
    %7 = arith.mulf %5, %6 : vector<16x27xf32>
    %8 = vector.extract_strided_slice %0 {offsets = [0, 1], sizes = [16, 1], strides = [1, 1]} : vector<16x3xf32> to vector<16x1xf32>
    %9 = vector.extract_strided_slice %1 {offsets = [1, 0], sizes = [1, 27], strides = [1, 1]} : vector<3x27xf32> to vector<1x27xf32>
    %10 = vector.broadcast %8 : vector<16x1xf32> to vector<16x27xf32>
    %11 = vector.broadcast %9 : vector<1x27xf32> to vector<16x27xf32>
    %12 = arith.mulf %10, %11 : vector<16x27xf32>
    %13 = arith.addf %7, %12 : vector<16x27xf32>
    %14 = vector.extract_strided_slice %0 {offsets = [0, 2], sizes = [16, 1], strides = [1, 1]} : vector<16x3xf32> to vector<16x1xf32>
    %15 = vector.extract_strided_slice %1 {offsets = [2, 0], sizes = [1, 27], strides = [1, 1]} : vector<3x27xf32> to vector<1x27xf32>
    %16 = vector.broadcast %14 : vector<16x1xf32> to vector<16x27xf32>
    %17 = vector.broadcast %15 : vector<1x27xf32> to vector<16x27xf32>
    %18 = arith.mulf %16, %17 : vector<16x27xf32>
    %19 = arith.addf %13, %18 : vector<16x27xf32>
    %20 = math.sin %19 : vector<16x27xf32>
    %21 = math.cos %19 : vector<16x27xf32>
    %c0_i32 = arith.constant 0 : i32
    %22 = vector.broadcast %c0_i32 : i32 to vector<1x27xi32>
    %23 = arith.cmpi eq, %2, %22 : vector<1x27xi32>
    %c2_i32 = arith.constant 2 : i32
    %24 = vector.broadcast %c2_i32 : i32 to vector<1x27xi32>
    %25 = arith.cmpi eq, %2, %24 : vector<1x27xi32>
    %26 = vector.shape_cast %25 : vector<1x27xi1> to vector<1x27xi1>
    %27 = vector.broadcast %26 : vector<1x27xi1> to vector<16x27xi1>
    %28 = arith.select %27, %21, %20 : vector<16x27xi1>, vector<16x27xf32>
    %29 = vector.shape_cast %23 : vector<1x27xi1> to vector<1x27xi1>
    %30 = vector.broadcast %29 : vector<1x27xi1> to vector<16x27xi1>
    %31 = arith.select %30, %19, %28 : vector<16x27xi1>, vector<16x27xf32>
    %c0_5 = arith.constant 0 : index
    %c0_6 = arith.constant 0 : index
    %32 = vector.load %arg4[%c0_5, %c0_6] : memref<16x27xf32, #tpu.memory_space<vmem>>, vector<16x27xf32>
    tpu.vector_store %arg4[%c0_5, %c0_6], %31 {strides = array<i32>} : memref<16x27xf32, #tpu.memory_space<vmem>>, vector<16x27xf32>,
    return
  }
  func.func @transform_0(%arg0: i32) -> (i32, i32) {
    %c0_i32 = arith.constant 0 : i32
    %c0_i32_0 = arith.constant 0 : i32
    %c0_i32_1 = arith.constant 0 : i32
    return %c0_i32, %c0_i32_0 : i32, i32
  }
  func.func @transform_1(%arg0: i32) -> (i32, i32) {
    %c0_i32 = arith.constant 0 : i32
    %c0_i32_0 = arith.constant 0 : i32
    %c0_i32_1 = arith.constant 0 : i32
    return %c0_i32, %c0_i32_0 : i32, i32
  }
  func.func @transform_2(%arg0: i32) -> (i32, i32) {
    %c0_i32 = arith.constant 0 : i32
    %c0_i32_0 = arith.constant 0 : i32
    return %arg0, %c0_i32 : i32, i32
  }
  func.func @transform_3(%arg0: i32) -> (i32, i32) {
    %c0_i32 = arith.constant 0 : i32
    %c0_i32_0 = arith.constant 0 : i32
    return %arg0, %c0_i32 : i32, i32
  }
}

</mosaic_0001>

<llo_original>
// kernel: tpu_custom_call.1
$region0: #{tpu_custom_call.1}
  #allocation0 [shape = 'u32[]', space=smem, size = 0x4, offset = 0x4, fixed_abs, tag = 'smem constant byte address 0x4 - core index']
  #allocation1 [shape = 'u32[144,128]{1,0:T(1,128)}', space=vmem, size = 0x12000, scoped, tag = 'internal scratch']
  %s0 = inlined_call_operand.vmem [shape: f32[3,27], index: 0, kind: input, shape index: {}]
  %s1 = inlined_call_operand.vmem [shape: s32[1,27], index: 1, kind: input, shape index: {}]
  %s2 = inlined_call_operand.vmem [shape: f32[16,3], index: 2, kind: input, shape index: {}]
  %s3 = inlined_call_operand.hbm [shape: f32[16,27], index: 3, kind: output, shape index: {}]
  %s4 = sld [smem:[#allocation0]]
  $region22: #{tpu_custom_call.1} parent=0
    _
  %s6 = ssub.s32 1, %s4
  %s7 = scalar_select 0, %s6, %s4
  $region1: #{tpu_custom_call.1} parent=0
    #allocation2 [shape = 'u8[8192]{0}', space=vmem, size = 0x2000, scoped, tag = 'output window, operand 0, single buffered']
    #allocation3 [shape = 's32[1]{0}', space=sflag, size = 0x4, scoped, tag = 'scoped memory for tpu_custom_call.1']
    %8 = vsyncpa [#allocation3], 0
    // Predicated region
    $region2: #{tpu_custom_call.1} parent=1 // pred_check
      _
    $region3: #{tpu_custom_call.1} parent=1 // pred_check_branch
      %10 = sbr.rel (0) target = $region5
    $region4: #{tpu_custom_call.1} parent=1 // pred_region
      _
    $region5: #{tpu_custom_call.1} parent=1 // pred_fallthru
      _
    // Predicated region
    $region6: #{tpu_custom_call.1} parent=1 // pred_check
      _
    $region7: #{tpu_custom_call.1} parent=1 // pred_check_branch
      %12 = sbr.rel (0) target = $region9
    $region8: #{tpu_custom_call.1} parent=1 // pred_region
      _
    $region9: #{tpu_custom_call.1} parent=1 // pred_fallthru
      _
    // Predicated region
    $region10: #{tpu_custom_call.1} parent=1 // pred_check
      _
    $region11: #{tpu_custom_call.1} parent=1 // pred_check_branch
      %14 = sbr.rel (0) target = $region13
    $region12: #{tpu_custom_call.1} parent=1 // pred_region
      _
    $region13: #{tpu_custom_call.1} parent=1 // pred_fallthru
      _
    %v15 = vld [vmem:[%s2] sm:$0xff]
    %v16 = vld [vmem:[%s2 + $0x8] sm:$0xff]
    %v17 = vld [vmem:[%s0] sm:$0x7]
    %v18 = vld [vmem:[%s1] sm:$0x1]
    %20 = vset.pattern.permute.xlu0 0
    %21 = vperm.xlu0 %20, %v15
    %v22 = vpop.permute.xlu0 %21
    %25 = vset.pattern.permute.xlu0 0
    %26 = vperm.xlu0 %25, %v16
    %v27 = vpop.permute.xlu0 %26
    %v29 = vlaneseq
    %v30 = vshrl.u32 %v29, 7
    %v31 = vsub.s32 0, %v30
    %v32 = vrot.slane %v17, %v31
    %v33 = vmul.f32 %v22, %v32
    %v34 = vmul.f32 %v27, %v32
    %35 = vset.pattern.permute.xlu0 1
    %36 = vperm.xlu0 %35, %v15
    %v37 = vpop.permute.xlu0 %36
    %39 = vset.pattern.permute.xlu0 1
    %40 = vperm.xlu0 %39, %v16
    %v41 = vpop.permute.xlu0 %40
    %v43 = vlaneseq
    %v44 = vshrl.u32 %v43, 7
    %v45 = vsub.s32 1, %v44
    %v46 = vrot.slane %v17, %v45
    %v47 = vmul.f32 %v37, %v46
    %v48 = vmul.f32 %v41, %v46
    %v49 = vadd.f32 %v33, %v47
    %v50 = vadd.f32 %v34, %v48
    %51 = vset.pattern.permute.xlu0 2
    %52 = vperm.xlu0 %51, %v15
    %v53 = vpop.permute.xlu0 %52
    %55 = vset.pattern.permute.xlu0 2
    %56 = vperm.xlu0 %55, %v16
    %v57 = vpop.permute.xlu0 %56
    %v59 = vlaneseq
    %v60 = vshrl.u32 %v59, 7
    %v61 = vsub.s32 2, %v60
    %v62 = vrot.slane %v17, %v61
    %v63 = vmul.f32 %v53, %v62
    %v64 = vmul.f32 %v57, %v62
    %v65 = vadd.f32 %v49, %v63
    %v66 = vadd.f32 %v50, %v64
    %v67 = vand.u32 2147483647, %v65
    %vm68 = vcmp.le.f32.partialorder %v67, 0.7853982
    %vm69 = vcmp.lt.s32.totalorder %v65, 0
    %v70 = vand.u32 %v65, 2139095040
    %v71 = vshrl.u32 %v70, 23
    %v72 = vsub.s32 %v71, 127
    %v73 = vand.u32 2147483647, %v65
    %v74 = vand.u32 %v73, 8388607
    %v75 = vor.u32 %v74, 8388608
    %v76 = vsub.s32 0, %v75
    %v77 = vadd.s32 %v72, 1
    %vm78 = vcmp.gt.s32.totalorder %v77, 0
    %v79 = vsel %vm78, %v77, 0
    %v80 = vshrl.u32 %v79, 5
    %v81 = vand.u32 %v79, 31
    %v82 = vsub.s32 32, %v81
    %v83 = vshrl.u32 683565275, %v82
    %v84 = vshll.u32 683565275, %v81
    %v85 = vshrl.u32 2475754826, %v82
    %v86 = vor.u32 %v84, %v85
    %v87 = vshll.u32 2475754826, %v81
    %v88 = vshrl.u32 2131351028, %v82
    %v89 = vor.u32 %v87, %v88
    %v90 = vshll.u32 2131351028, %v81
    %v91 = vshrl.u32 2102212464, %v82
    %v92 = vor.u32 %v90, %v91
    %v93 = vshll.u32 2102212464, %v81
    %v94 = vshrl.u32 920167782, %v82
    %v95 = vor.u32 %v93, %v94
    %v96 = vshll.u32 920167782, %v81
    %v97 = vshrl.u32 1326507024, %v82
    %v98 = vor.u32 %v96, %v97
    %vm99 = vcmp.lt.s32.totalorder %v80, 1
    %vm100 = vcmp.lt.s32.totalorder %v80, 2
    %vm101 = vcmp.lt.s32.totalorder %v80, 3
    %vm102 = vcmp.lt.s32.totalorder %v80, 4
    %v103 = vsel %vm99, %v83, %v86
    %v104 = vsel %vm102, %v92, 2102212464
    %v105 = vsel %vm101, %v89, %v104
    %v106 = vsel %vm100, %v103, %v105
    %v107 = vsel %vm99, %v86, %v89
    %v108 = vsel %vm102, %v95, 920167782
    %v109 = vsel %vm101, %v92, %v108
    %v110 = vsel %vm100, %v107, %v109
    %v111 = vsel %vm99, %v89, %v92
    %v112 = vsel %vm102, %v98, 1326507024
    %v113 = vsel %vm101, %v95, %v112
    %v114 = vsel %vm100, %v111, %v113
    %v115 = vshll.u32 %v75, 8
    %v116 = vmul.u32.u64.compose %v115, %v114
    %v117 = vextract.low.u32 %v116
    %v118 = vextract.high.u32 %v116
    %v119 = vmul.u32.u64.compose %v115, %v110
    %v120 = vextract.low.u32 %v119
    %v121 = vextract.high.u32 %v119
    %v122 = vmul.u32 %v115, %v106
    %v123 = vadd.s32 %v118, %v120
    %vm124 = vc.u32 %v118, %v120
    %v125 = vadd.s32 %v121, 1
    %v126 = vsel %vm124, %v125, %v121
    %v127 = vadd.s32 %v122, %v126
    %v128 = vadd.s32 %v127, 536870912
    %v129 = vshrl.u32 %v128, 30
    %v130 = vshll.u32 %v129, 30
    %v131 = vsub.s32 %v127, %v130
    %vm132 = vcmp.lt.s32.totalorder %v131, 0
    %v133 = vsub.s32 0, %v131
    %v134 = vsel %vm132, %v133, %v131
    %v135 = vclz %v134
    %v136 = vsub.s32 %v135, 2
    %vm137 = vcmp.gt.s32.totalorder 0, %v136
    %v138 = vsel %vm137, 0, %v136
    %v139 = vsub.s32 32, %v138
    %v140 = vshll.u32 %v131, %v138
    %v141 = vshrl.u32 %v123, %v139
    %v142 = vor.u32 %v140, %v141
    %v143 = vsub.s32 4294967266, %v138
    %v144 = vadd.s32 %v143, 127
    %v145 = vshll.u32 %v144, 23
    %v146 = vor.u32 4788187, %v145
    %v147 = vand.u32 2147483647, %v146
    %v149 = vcvt.s32.f32 %v142
    %v150 = vmul.f32 %v149, %v147
    %v151 = vxor.u32 %v150, 2147483648
    %v152 = vsel %vm69, %v151, %v150
    %v153 = vsub.s32 4, %v129
    %v154 = vsel %vm69, %v153, %v129
    %v155 = vsel %vm68, %v65, %v152
    %v156 = vsel %vm68, 0, %v154
    %v157 = vcosq.f32.pop %v155
    %v158 = vsinq.f32.pop %v155
    %vm159 = vweird.f32 %v65
    %v160 = vadd.s32 %v156, 3
    %v161 = vand.u32 %v160, 3
    %vm162 = vcmp.lt.s32.totalorder %v161, 2
    %vm163 = vcmp.eq.s32.totalorder %v161, 0
    %v164 = vxor.u32 %v158, 2147483648
    %v165 = vsel %vm163, %v157, %v164
    %vm166 = vcmp.eq.s32.totalorder %v161, 2
    %v167 = vxor.u32 %v157, 2147483648
    %v168 = vsel %vm166, %v167, %v158
    %v169 = vsel %vm162, %v165, %v168
    %v170 = vsel %vm159, nan, %v169
    %v171 = vand.u32 2147483647, %v66
    %vm172 = vcmp.le.f32.partialorder %v171, 0.7853982
    %vm173 = vcmp.lt.s32.totalorder %v66, 0
    %v174 = vand.u32 %v66, 2139095040
    %v175 = vshrl.u32 %v174, 23
    %v176 = vsub.s32 %v175, 127
    %v177 = vand.u32 2147483647, %v66
    %v178 = vand.u32 %v177, 8388607
    %v179 = vor.u32 %v178, 8388608
    %v180 = vsub.s32 0, %v179
    %v181 = vadd.s32 %v176, 1
    %vm182 = vcmp.gt.s32.totalorder %v181, 0
    %v183 = vsel %vm182, %v181, 0
    %v184 = vshrl.u32 %v183, 5
    %v185 = vand.u32 %v183, 31
    %v186 = vsub.s32 32, %v185
    %v187 = vshrl.u32 683565275, %v186
    %v188 = vshll.u32 683565275, %v185
    %v189 = vshrl.u32 2475754826, %v186
    %v190 = vor.u32 %v188, %v189
    %v191 = vshll.u32 2475754826, %v185
    %v192 = vshrl.u32 2131351028, %v186
    %v193 = vor.u32 %v191, %v192
    %v194 = vshll.u32 2131351028, %v185
    %v195 = vshrl.u32 2102212464, %v186
    %v196 = vor.u32 %v194, %v195
    %v197 = vshll.u32 2102212464, %v185
    %v198 = vshrl.u32 920167782, %v186
    %v199 = vor.u32 %v197, %v198
    %v200 = vshll.u32 920167782, %v185
    %v201 = vshrl.u32 1326507024, %v186
    %v202 = vor.u32 %v200, %v201
    %vm203 = vcmp.lt.s32.totalorder %v184, 1
    %vm204 = vcmp.lt.s32.totalorder %v184, 2
    %vm205 = vcmp.lt.s32.totalorder %v184, 3
    %vm206 = vcmp.lt.s32.totalorder %v184, 4
    %v207 = vsel %vm203, %v187, %v190
    %v208 = vsel %vm206, %v196, 2102212464
    %v209 = vsel %vm205, %v193, %v208
    %v210 = vsel %vm204, %v207, %v209
    %v211 = vsel %vm203, %v190, %v193
    %v212 = vsel %vm206, %v199, 920167782
    %v213 = vsel %vm205, %v196, %v212
    %v214 = vsel %vm204, %v211, %v213
    %v215 = vsel %vm203, %v193, %v196
    %v216 = vsel %vm206, %v202, 1326507024
    %v217 = vsel %vm205, %v199, %v216
    %v218 = vsel %vm204, %v215, %v217
    %v219 = vshll.u32 %v179, 8
    %v220 = vmul.u32.u64.compose %v219, %v218
    %v221 = vextract.low.u32 %v220
    %v222 = vextract.high.u32 %v220
    %v223 = vmul.u32.u64.compose %v219, %v214
    %v224 = vextract.low.u32 %v223
    %v225 = vextract.high.u32 %v223
    %v226 = vmul.u32 %v219, %v210
    %v227 = vadd.s32 %v222, %v224
    %vm228 = vc.u32 %v222, %v224
    %v229 = vadd.s32 %v225, 1
    %v230 = vsel %vm228, %v229, %v225
    %v231 = vadd.s32 %v226, %v230
    %v232 = vadd.s32 %v231, 536870912
    %v233 = vshrl.u32 %v232, 30
    %v234 = vshll.u32 %v233, 30
    %v235 = vsub.s32 %v231, %v234
    %vm236 = vcmp.lt.s32.totalorder %v235, 0
    %v237 = vsub.s32 0, %v235
    %v238 = vsel %vm236, %v237, %v235
    %v239 = vclz %v238
    %v240 = vsub.s32 %v239, 2
    %vm241 = vcmp.gt.s32.totalorder 0, %v240
    %v242 = vsel %vm241, 0, %v240
    %v243 = vsub.s32 32, %v242
    %v244 = vshll.u32 %v235, %v242
    %v245 = vshrl.u32 %v227, %v243
    %v246 = vor.u32 %v244, %v245
    %v247 = vsub.s32 4294967266, %v242
    %v248 = vadd.s32 %v247, 127
    %v249 = vshll.u32 %v248, 23
    %v250 = vor.u32 4788187, %v249
    %v251 = vand.u32 2147483647, %v250
    %v253 = vcvt.s32.f32 %v246
    %v254 = vmul.f32 %v253, %v251
    %v255 = vxor.u32 %v254, 2147483648
    %v256 = vsel %vm173, %v255, %v254
    %v257 = vsub.s32 4, %v233
    %v258 = vsel %vm173, %v257, %v233
    %v259 = vsel %vm172, %v66, %v256
    %v260 = vsel %vm172, 0, %v258
    %v261 = vcosq.f32.pop %v259
    %v262 = vsinq.f32.pop %v259
    %vm263 = vweird.f32 %v66
    %v264 = vadd.s32 %v260, 3
    %v265 = vand.u32 %v264, 3
    %vm266 = vcmp.lt.s32.totalorder %v265, 2
    %vm267 = vcmp.eq.s32.totalorder %v265, 0
    %v268 = vxor.u32 %v262, 2147483648
    %v269 = vsel %vm267, %v261, %v268
    %vm270 = vcmp.eq.s32.totalorder %v265, 2
    %v271 = vxor.u32 %v261, 2147483648
    %v272 = vsel %vm270, %v271, %v262
    %v273 = vsel %vm266, %v269, %v272
    %v274 = vsel %vm263, nan, %v273
    %v275 = vand.u32 2147483647, %v65
    %vm276 = vcmp.le.f32.partialorder %v275, 0.7853982
    %vm277 = vcmp.lt.s32.totalorder %v65, 0
    %v278 = vand.u32 %v65, 2139095040
    %v279 = vshrl.u32 %v278, 23
    %v280 = vsub.s32 %v279, 127
    %v281 = vand.u32 2147483647, %v65
    %v282 = vand.u32 %v281, 8388607
    %v283 = vor.u32 %v282, 8388608
    %v284 = vsub.s32 0, %v283
    %v285 = vadd.s32 %v280, 1
    %vm286 = vcmp.gt.s32.totalorder %v285, 0
    %v287 = vsel %vm286, %v285, 0
    %v288 = vshrl.u32 %v287, 5
    %v289 = vand.u32 %v287, 31
    %v290 = vsub.s32 32, %v289
    %v291 = vshrl.u32 683565275, %v290
    %v292 = vshll.u32 683565275, %v289
    %v293 = vshrl.u32 2475754826, %v290
    %v294 = vor.u32 %v292, %v293
    %v295 = vshll.u32 2475754826, %v289
    %v296 = vshrl.u32 2131351028, %v290
    %v297 = vor.u32 %v295, %v296
    %v298 = vshll.u32 2131351028, %v289
    %v299 = vshrl.u32 2102212464, %v290
    %v300 = vor.u32 %v298, %v299
    %v301 = vshll.u32 2102212464, %v289
    %v302 = vshrl.u32 920167782, %v290
    %v303 = vor.u32 %v301, %v302
    %v304 = vshll.u32 920167782, %v289
    %v305 = vshrl.u32 1326507024, %v290
    %v306 = vor.u32 %v304, %v305
    %vm307 = vcmp.lt.s32.totalorder %v288, 1
    %vm308 = vcmp.lt.s32.totalorder %v288, 2
    %vm309 = vcmp.lt.s32.totalorder %v288, 3
    %vm310 = vcmp.lt.s32.totalorder %v288, 4
    %v311 = vsel %vm307, %v291, %v294
    %v312 = vsel %vm310, %v300, 2102212464
    %v313 = vsel %vm309, %v297, %v312
    %v314 = vsel %vm308, %v311, %v313
    %v315 = vsel %vm307, %v294, %v297
    %v316 = vsel %vm310, %v303, 920167782
    %v317 = vsel %vm309, %v300, %v316
    %v318 = vsel %vm308, %v315, %v317
    %v319 = vsel %vm307, %v297, %v300
    %v320 = vsel %vm310, %v306, 1326507024
    %v321 = vsel %vm309, %v303, %v320
    %v322 = vsel %vm308, %v319, %v321
    %v323 = vshll.u32 %v283, 8
    %v324 = vmul.u32.u64.compose %v323, %v322
    %v325 = vextract.low.u32 %v324
    %v326 = vextract.high.u32 %v324
    %v327 = vmul.u32.u64.compose %v323, %v318
    %v328 = vextract.low.u32 %v327
    %v329 = vextract.high.u32 %v327
    %v330 = vmul.u32 %v323, %v314
    %v331 = vadd.s32 %v326, %v328
    %vm332 = vc.u32 %v326, %v328
    %v333 = vadd.s32 %v329, 1
    %v334 = vsel %vm332, %v333, %v329
    %v335 = vadd.s32 %v330, %v334
    %v336 = vadd.s32 %v335, 536870912
    %v337 = vshrl.u32 %v336, 30
    %v338 = vshll.u32 %v337, 30
    %v339 = vsub.s32 %v335, %v338
    %vm340 = vcmp.lt.s32.totalorder %v339, 0
    %v341 = vsub.s32 0, %v339
    %v342 = vsel %vm340, %v341, %v339
    %v343 = vclz %v342
    %v344 = vsub.s32 %v343, 2
    %vm345 = vcmp.gt.s32.totalorder 0, %v344
    %v346 = vsel %vm345, 0, %v344
    %v347 = vsub.s32 32, %v346
    %v348 = vshll.u32 %v339, %v346
    %v349 = vshrl.u32 %v331, %v347
    %v350 = vor.u32 %v348, %v349
    %v351 = vsub.s32 4294967266, %v346
    %v352 = vadd.s32 %v351, 127
    %v353 = vshll.u32 %v352, 23
    %v354 = vor.u32 4788187, %v353
    %v355 = vand.u32 2147483647, %v354
    %v357 = vcvt.s32.f32 %v350
    %v358 = vmul.f32 %v357, %v355
    %v359 = vxor.u32 %v358, 2147483648
    %v360 = vsel %vm277, %v359, %v358
    %v361 = vsub.s32 4, %v337
    %v362 = vsel %vm277, %v361, %v337
    %v363 = vsel %vm276, %v65, %v360
    %v364 = vsel %vm276, 0, %v362
    %v365 = vcosq.f32.pop %v363
    %v366 = vsinq.f32.pop %v363
    %vm367 = vweird.f32 %v65
    %v368 = vand.u32 %v364, 3
    %vm369 = vcmp.lt.s32.totalorder %v368, 2
    %vm370 = vcmp.eq.s32.totalorder %v368, 0
    %v371 = vxor.u32 %v366, 2147483648
    %v372 = vsel %vm370, %v365, %v371
    %vm373 = vcmp.eq.s32.totalorder %v368, 2
    %v374 = vxor.u32 %v365, 2147483648
    %v375 = vsel %vm373, %v374, %v366
    %v376 = vsel %vm369, %v372, %v375
    %v377 = vsel %vm367, nan, %v376
    %v378 = vand.u32 2147483647, %v66
    %vm379 = vcmp.le.f32.partialorder %v378, 0.7853982
    %vm380 = vcmp.lt.s32.totalorder %v66, 0
    %v381 = vand.u32 %v66, 2139095040
    %v382 = vshrl.u32 %v381, 23
    %v383 = vsub.s32 %v382, 127
    %v384 = vand.u32 2147483647, %v66
    %v385 = vand.u32 %v384, 8388607
    %v386 = vor.u32 %v385, 8388608
    %v387 = vsub.s32 0, %v386
    %v388 = vadd.s32 %v383, 1
    %vm389 = vcmp.gt.s32.totalorder %v388, 0
    %v390 = vsel %vm389, %v388, 0
    %v391 = vshrl.u32 %v390, 5
    %v392 = vand.u32 %v390, 31
    %v393 = vsub.s32 32, %v392
    %v394 = vshrl.u32 683565275, %v393
    %v395 = vshll.u32 683565275, %v392
    %v396 = vshrl.u32 2475754826, %v393
    %v397 = vor.u32 %v395, %v396
    %v398 = vshll.u32 2475754826, %v392
    %v399 = vshrl.u32 2131351028, %v393
    %v400 = vor.u32 %v398, %v399
    %v401 = vshll.u32 2131351028, %v392
    %v402 = vshrl.u32 2102212464, %v393
    %v403 = vor.u32 %v401, %v402
    %v404 = vshll.u32 2102212464, %v392
    %v405 = vshrl.u32 920167782, %v393
    %v406 = vor.u32 %v404, %v405
    %v407 = vshll.u32 920167782, %v392
    %v408 = vshrl.u32 1326507024, %v393
    %v409 = vor.u32 %v407, %v408
    %vm410 = vcmp.lt.s32.totalorder %v391, 1
    %vm411 = vcmp.lt.s32.totalorder %v391, 2
    %vm412 = vcmp.lt.s32.totalorder %v391, 3
    %vm413 = vcmp.lt.s32.totalorder %v391, 4
    %v414 = vsel %vm410, %v394, %v397
    %v415 = vsel %vm413, %v403, 2102212464
    %v416 = vsel %vm412, %v400, %v415
    %v417 = vsel %vm411, %v414, %v416
    %v418 = vsel %vm410, %v397, %v400
    %v419 = vsel %vm413, %v406, 920167782
    %v420 = vsel %vm412, %v403, %v419
    %v421 = vsel %vm411, %v418, %v420
    %v422 = vsel %vm410, %v400, %v403
    %v423 = vsel %vm413, %v409, 1326507024
    %v424 = vsel %vm412, %v406, %v423
    %v425 = vsel %vm411, %v422, %v424
    %v426 = vshll.u32 %v386, 8
    %v427 = vmul.u32.u64.compose %v426, %v425
    %v428 = vextract.low.u32 %v427
    %v429 = vextract.high.u32 %v427
    %v430 = vmul.u32.u64.compose %v426, %v421
    %v431 = vextract.low.u32 %v430
    %v432 = vextract.high.u32 %v430
    %v433 = vmul.u32 %v426, %v417
    %v434 = vadd.s32 %v429, %v431
    %vm435 = vc.u32 %v429, %v431
    %v436 = vadd.s32 %v432, 1
    %v437 = vsel %vm435, %v436, %v432
    %v438 = vadd.s32 %v433, %v437
    %v439 = vadd.s32 %v438, 536870912
    %v440 = vshrl.u32 %v439, 30
    %v441 = vshll.u32 %v440, 30
    %v442 = vsub.s32 %v438, %v441
    %vm443 = vcmp.lt.s32.totalorder %v442, 0
    %v444 = vsub.s32 0, %v442
    %v445 = vsel %vm443, %v444, %v442
    %v446 = vclz %v445
    %v447 = vsub.s32 %v446, 2
    %vm448 = vcmp.gt.s32.totalorder 0, %v447
    %v449 = vsel %vm448, 0, %v447
    %v450 = vsub.s32 32, %v449
    %v451 = vshll.u32 %v442, %v449
    %v452 = vshrl.u32 %v434, %v450
    %v453 = vor.u32 %v451, %v452
    %v454 = vsub.s32 4294967266, %v449
    %v455 = vadd.s32 %v454, 127
    %v456 = vshll.u32 %v455, 23
    %v457 = vor.u32 4788187, %v456
    %v458 = vand.u32 2147483647, %v457
    %v460 = vcvt.s32.f32 %v453
    %v461 = vmul.f32 %v460, %v458
    %v462 = vxor.u32 %v461, 2147483648
    %v463 = vsel %vm380, %v462, %v461
    %v464 = vsub.s32 4, %v440
    %v465 = vsel %vm380, %v464, %v440
    %v466 = vsel %vm379, %v66, %v463
    %v467 = vsel %vm379, 0, %v465
    %v468 = vcosq.f32.pop %v466
    %v469 = vsinq.f32.pop %v466
    %vm470 = vweird.f32 %v66
    %v471 = vand.u32 %v467, 3
    %vm472 = vcmp.lt.s32.totalorder %v471, 2
    %vm473 = vcmp.eq.s32.totalorder %v471, 0
    %v474 = vxor.u32 %v469, 2147483648
    %v475 = vsel %vm473, %v468, %v474
    %vm476 = vcmp.eq.s32.totalorder %v471, 2
    %v477 = vxor.u32 %v468, 2147483648
    %v478 = vsel %vm476, %v477, %v469
    %v479 = vsel %vm472, %v475, %v478
    %v480 = vsel %vm470, nan, %v479
    %vm481 = vcmp.eq.s32.totalorder %v18, 0
    %vm482 = vcmp.eq.s32.totalorder %v18, 2
    %v483 = vsel %vm482, 1, 0
    %v484 = vlaneseq
    %v485 = vshrl.u32 %v484, 7
    %v486 = vsub.s32 0, %v485
    %v487 = vrot.slane %v483, %v486
    %vm488 = vcmp.eq.s32.totalorder %v487, 1
    %v489 = vsel %vm488, %v377, %v170
    %v490 = vsel %vm488, %v480, %v274
    %v491 = vsel %vm481, 1, 0
    %v492 = vlaneseq
    %v493 = vshrl.u32 %v492, 7
    %v494 = vsub.s32 0, %v493
    %v495 = vrot.slane %v491, %v494
    %vm496 = vcmp.eq.s32.totalorder %v495, 1
    %v497 = vsel %vm496, %v65, %v489
    %v498 = vsel %vm496, %v66, %v490
    %vm499 = vcmask 220160
    %500 = vst.msk [vmem:[#allocation2] sm:$0xff] %vm499, %v497
    %501 = vst.msk [vmem:[#allocation2 + $0x8] sm:$0xff] %vm499, %v498
    // Predicated region
    $region14: #{tpu_custom_call.1} parent=1 // pred_check
      _
    $region15: #{tpu_custom_call.1} parent=1 // pred_check_branch
      %503 = sbr.rel (0) target = $region17
    $region16: #{tpu_custom_call.1} parent=1 // pred_region
      %s505 = ssub.s32 256, 256
      %506 = vsyncadd [#allocation3], %s505
      %s507 = sshll.u32 [#allocation2], 4
      %s508 = int_to_ptr.vmem [resolvable:$true] %s507
      %513 = dma.vmem_to_hbm [thread:$0]  %s508, 256, %s3, [#allocation3], 128, 128, 8
    $region17: #{tpu_custom_call.1} parent=1 // pred_fallthru
      _
    // Predicated region
    $region18: #{tpu_custom_call.1} parent=1 // pred_check
      _
    $region19: #{tpu_custom_call.1} parent=1 // pred_check_branch
      %515 = sbr.rel (0) target = $region21
    $region20: #{tpu_custom_call.1} parent=1 // pred_region
      %516 = dma.done [#allocation3], 256
    $region21: #{tpu_custom_call.1} parent=1 // pred_fallthru
      _
    %517 = vsyncpa [#allocation3], 1

</llo_original>
